<compile_context>
chip_gen: v7x
topology: tpu7x:2x2x1
jax: 0.10.0
libtpu: 0.0.40
codegen_flags: <defaults>
</compile_context>

<pallas_src>
import functools
import math

import jax
import jax.numpy as jnp
from jax.experimental import pallas as pl
from jax.experimental.pallas import tpu as pltpu


# --------------------------------------------------------------------------
# Small helpers
# --------------------------------------------------------------------------
def _round_up(x, m):
    return ((x + m - 1) // m) * m


def _pad_axis(a, axis, target):
    pad = target - a.shape[axis]
    if pad <= 0:
        return a
    widths = [(0, 0)] * a.ndim
    widths[axis] = (0, pad)
    return jnp.pad(a, widths)


def _vmem_limit_bytes():
    """Per-generation scoped-VMEM limit (~48 MiB on v7x, ~96 MiB on v5e/v6e)."""
    try:
        cap = int(pltpu.get_tpu_info().vmem_capacity_bytes)
        return max(32 * 1024 * 1024, min(int(cap * 0.75), 100 * 1024 * 1024))
    except Exception:
        return 48 * 1024 * 1024  # conservative fallback (fits every generation)


def _seq_tiles(seq_len):
    """Padded sequence length and (q, kv) tile sizes for attention."""
    if seq_len <= 256:
        s_pad = _round_up(seq_len, 8)
        return s_pad, s_pad, s_pad
    s_pad = _round_up(seq_len, 256)
    return s_pad, 256, 256


# --------------------------------------------------------------------------
# Kernel 1: LayerNorm fused into the prologue of a (stacked) linear.
#   out[g] = act(LN(x) @ w[g] + bias)    -- LN cached in VMEM scratch.
# PyTorch LayerNormalization semantics: unbiased std, eps added to std.
# --------------------------------------------------------------------------
def _ln_linear_kernel(x_ref, alpha_ref, beta_ref, w_ref, *rest,
                      eps, features, has_bias, activation):
    if has_bias:
        b_ref, o_ref, xn_ref = rest
    else:
        b_ref = None
        o_ref, xn_ref = rest

    g = pl.program_id(1)
    n = pl.program_id(2)

    @pl.when((g == 0) & (n == 0))
    def _():
        x = x_ref[...].astype(jnp.float32)
        mean = jnp.mean(x, axis=-1, keepdims=True)
        diff = x - mean
        # torch x.std(dim=-1) is unbiased (divide by N-1); eps added to std.
        var = jnp.sum(diff * diff, axis=-1, keepdims=True) / jnp.float32(features - 1)
        inv = pl.reciprocal(jnp.sqrt(var) + jnp.float32(eps), approx=True)
        # NB: (diff * inv) first -- zero-padded rows stay finite (diff == 0).
        xn_ref[...] = (diff * inv) * alpha_ref[...] + beta_ref[...]

    out = jnp.dot(xn_ref[...], w_ref[...], preferred_element_type=jnp.float32)
    if has_bias:
        out = out + b_ref[...]
    if activation == "relu":
        out = jnp.maximum(out, 0.0)
    o_ref[...] = out.astype(o_ref.dtype)


def ln_linear_pallas(x2d, alpha, beta, w_stacked, bias=None, activation=None,
                     *, eps=1e-6, tm_max=512, tn_max=512):
    """x2d: (M, D); w_stacked: (G, D, N); bias: (N,) or None -> (G, M, N) f32."""
    M, D = x2d.shape
    G, Dw, N = w_stacked.shape
    assert D == Dw

    def _tile(dim, cap, align):
        if dim <= cap:
            return dim, dim                    # full-extent block (always legal)
        t = max(align, (cap // align) * align)
        return t, _round_up(dim, t)

    tm, m_pad = _tile(M, tm_max, 8)
    tn, n_pad = _tile(N, tn_max, 128)

    x_p = _pad_axis(x2d, 0, m_pad)
    w_p = _pad_axis(w_stacked, 2, n_pad)
    alpha2d = alpha.reshape(1, D).astype(jnp.float32)
    beta2d = beta.reshape(1, D).astype(jnp.float32)

    inputs = [x_p, alpha2d, beta2d, w_p]
    in_specs = [
        pl.BlockSpec((tm, D), lambda i, g, n: (i, 0)),
        pl.BlockSpec((1, D), lambda i, g, n: (0, 0)),
        pl.BlockSpec((1, D), lambda i, g, n: (0, 0)),
        pl.BlockSpec((None, D, tn), lambda i, g, n: (g, 0, n)),
    ]
    has_bias = bias is not None
    if has_bias:
        inputs.append(_pad_axis(bias.reshape(1, N).astype(jnp.float32), 1, n_pad))
        in_specs.append(pl.BlockSpec((1, tn), lambda i, g, n: (0, n)))

    kernel = functools.partial(_ln_linear_kernel, eps=eps, features=D,
                               has_bias=has_bias, activation=activation)

    out = pl.pallas_call(
        kernel,
        out_shape=jax.ShapeDtypeStruct((G, m_pad, n_pad), jnp.float32),
        grid=(m_pad // tm, G, n_pad // tn),
        in_specs=in_specs,
        out_specs=pl.BlockSpec((None, tm, tn), lambda i, g, n: (g, i, n)),
        scratch_shapes=[pltpu.VMEM((tm, D), jnp.float32)],
        compiler_params=pltpu.CompilerParams(
            # g/n must stay on the same core as (g=0, n=0) for a given row
            # block (LN scratch), so only the row axis is "parallel".
            dimension_semantics=("parallel", "arbitrary", "arbitrary"),
            vmem_limit_bytes=_vmem_limit_bytes(),
        ),
    )(*inputs)
    if m_pad != M or n_pad != N:
        out = out[:, :M, :N]
    return out


# --------------------------------------------------------------------------
# Kernel 2: flash-style multi-head attention, heads packed per grid step.
# Reads per-head column slices directly from the (3, B, S_pad, D) QKV buffer.
# 1/sqrt(d_k) is pre-folded into w_q; mask arrives as an additive bias.
# --------------------------------------------------------------------------
def _attn_kernel(q_ref, k_ref, v_ref, bias_ref, o_ref, m_ref, l_ref, acc_ref,
                 *, heads, d_k):
    kv = pl.program_id(2)

    @pl.when(kv == 0)
    def _():
        m_ref[...] = jnp.full_like(m_ref, -jnp.inf)
        l_ref[...] = jnp.zeros_like(l_ref)
        acc_ref[...] = jnp.zeros_like(acc_ref)

    bias = bias_ref[...]                                    # (1, tkv), additive
    for h in range(heads):
        sl = slice(h * d_k, (h + 1) * d_k)
        q = q_ref[:, sl]                                    # (tq, d_k)
        k = k_ref[:, sl]                                    # (tkv, d_k)
        v = v_ref[:, sl]                                    # (tkv, d_k)
        s = jax.lax.dot_general(q, k, (((1,), (1,)), ((), ())),
                                preferred_element_type=jnp.float32)  # (tq, tkv)
        s = s + bias
        m_prev = m_ref[h]                                   # (tq, 1)
        m_new = jnp.maximum(m_prev, jnp.max(s, axis=-1, keepdims=True))
        a = jnp.exp(m_prev - m_new)
        p = jnp.exp(s - m_new)
        l_ref[h] = a * l_ref[h] + jnp.sum(p, axis=-1, keepdims=True)
        acc_ref[h] = a * acc_ref[h] + jnp.dot(p, v, preferred_element_type=jnp.float32)
        m_ref[h] = m_new

    @pl.when(kv == pl.num_programs(2) - 1)
    def _():
        for h in range(heads):
            sl = slice(h * d_k, (h + 1) * d_k)
            inv = pl.reciprocal(l_ref[h], approx=True)      # (tq, 1)
            o_ref[:, sl] = (acc_ref[h] * inv).astype(o_ref.dtype)


def attention_pallas(qkv, mask_bias, *, heads, d_k, tq, tkv):
    """qkv: (3, B, S_pad, D) f32; mask_bias: (B, 1, S_pad) additive (0 / -1e9).

    Returns (B, S_pad, D) attention output (heads packed along D)."""
    _, B, s_pad, D = qkv.shape
    kernel = functools.partial(_attn_kernel, heads=heads, d_k=d_k)
    return pl.pallas_call(
        kernel,
        out_shape=jax.ShapeDtypeStruct((B, s_pad, D), jnp.float32),
        grid=(B, s_pad // tq, s_pad // tkv),
        in_specs=[
            pl.BlockSpec((None, None, tq, D), lambda b, qi, ki: (0, b, qi, 0)),
            pl.BlockSpec((None, None, tkv, D), lambda b, qi, ki: (1, b, ki, 0)),
            pl.BlockSpec((None, None, tkv, D), lambda b, qi, ki: (2, b, ki, 0)),
            pl.BlockSpec((None, 1, tkv), lambda b, qi, ki: (b, 0, ki)),
        ],
        out_specs=pl.BlockSpec((None, tq, D), lambda b, qi, ki: (b, qi, 0)),
        scratch_shapes=[
            pltpu.VMEM((heads, tq, 1), jnp.float32),      # running max
            pltpu.VMEM((heads, tq, 1), jnp.float32),      # running sum
            pltpu.VMEM((heads, tq, d_k), jnp.float32),    # accumulator
        ],
        compiler_params=pltpu.CompilerParams(
            dimension_semantics=("parallel", "parallel", "arbitrary"),
            vmem_limit_bytes=_vmem_limit_bytes(),
        ),
    )(qkv, qkv, qkv, mask_bias)


# --------------------------------------------------------------------------
# Kernel 3: tiled linear y = act(x @ w + b) [+ residual], bias/ReLU/residual
# fused into the last-K epilogue (used for w_o and FFN linear_2).
# --------------------------------------------------------------------------
def _linear_kernel(*refs, has_bias, has_res, activation):
    idx = 0
    x_ref = refs[idx]; idx += 1
    w_ref = refs[idx]; idx += 1
    b_ref = refs[idx] if has_bias else None
    idx += int(has_bias)
    r_ref = refs[idx] if has_res else None
    idx += int(has_res)
    o_ref, acc_ref = refs[idx], refs[idx + 1]

    k = pl.program_id(2)

    @pl.when(k == 0)
    def _():
        acc_ref[...] = jnp.zeros_like(acc_ref)

    acc_ref[...] += jnp.dot(x_ref[...], w_ref[...],
                            preferred_element_type=jnp.float32)

    @pl.when(k == pl.num_programs(2) - 1)
    def _():
        out = acc_ref[...]
        if has_bias:
            out = out + b_ref[...]
        if activation == "relu":
            out = jnp.maximum(out, 0.0)
        if has_res:
            out = out + r_ref[...].astype(jnp.float32)
        o_ref[...] = out.astype(o_ref.dtype)


def linear_pallas(x2d, w, b=None, residual=None, activation=None,
                  *, tm_max=1024, tn_max=512, tk_max=512):
    """x2d: (M, K); w: (K, N) (torch Linear weight transposed)."""
    M, K = x2d.shape
    Kw, N = w.shape
    assert K == Kw

    def _tile(dim, cap):
        if dim <= cap:
            return dim, dim                  # full-extent block, no padding
        return cap, _round_up(dim, cap)      # caps are (8,128)-aligned

    tm, m_pad = _tile(M, tm_max)
    tn, n_pad = _tile(N, tn_max)
    tk, k_pad = _tile(K, tk_max)

    x_p = _pad_axis(_pad_axis(x2d, 0, m_pad), 1, k_pad)
    w_p = _pad_axis(_pad_axis(w, 0, k_pad), 1, n_pad)

    has_bias = b is not None
    has_res = residual is not None

    inputs = [x_p, w_p]
    in_specs = [
        pl.BlockSpec((tm, tk), lambda i, j, k: (i, k)),
        pl.BlockSpec((tk, tn), lambda i, j, k: (k, j)),
    ]
    if has_bias:
        inputs.append(_pad_axis(b.reshape(1, N).astype(jnp.float32), 1, n_pad))
        in_specs.append(pl.BlockSpec((1, tn), lambda i, j, k: (0, j)))
    if has_res:
        inputs.append(_pad_axis(_pad_axis(residual, 0, m_pad), 1, n_pad))
        in_specs.append(pl.BlockSpec((tm, tn), lambda i, j, k: (i, j)))

    kernel = functools.partial(
        _linear_kernel, has_bias=has_bias, has_res=has_res, activation=activation)

    out = pl.pallas_call(
        kernel,
        out_shape=jax.ShapeDtypeStruct((m_pad, n_pad), jnp.float32),
        grid=(m_pad // tm, n_pad // tn, k_pad // tk),
        in_specs=in_specs,
        out_specs=pl.BlockSpec((tm, tn), lambda i, j, k: (i, j)),
        scratch_shapes=[pltpu.VMEM((tm, tn), jnp.float32)],
        compiler_params=pltpu.CompilerParams(
            dimension_semantics=("parallel", "parallel", "arbitrary"),
            vmem_limit_bytes=_vmem_limit_bytes(),
        ),
    )(*inputs)
    if m_pad != M or n_pad != N:
        out = out[:M, :N]
    return out


# --------------------------------------------------------------------------
# EncoderBlock (inference / eval mode)
# --------------------------------------------------------------------------
class EncoderBlockPallas:
    """Pallas/JAX equivalent of the PyTorch EncoderBlock forward pass."""

    def __init__(self, features, d_ff, h, dropout=0.0, *, key):
        assert features % h == 0, "d_model must be divisible by h"
        self.features, self.h, self.d_k, self.d_ff = features, h, features // h, d_ff
        self.eps = 1e-6
        self.dropout = dropout    # TODO(synk): unused (eval-mode identity).

        ks = jax.random.split(key, 6)

        def init(k, fan_in, shape):
            bound = 1.0 / math.sqrt(fan_in)
            return jax.random.uniform(k, shape, jnp.float32, -bound, bound)

        D, F = features, d_ff
        # Weights stored as (in, out) == torch Linear weight transposed.
        self.w_q = init(ks[0], D, (D, D))
        self.w_k = init(ks[1], D, (D, D))
        self.w_v = init(ks[2], D, (D, D))
        self.w_o = init(ks[3], D, (D, D))
        self.w_1 = init(ks[4], D, (D, F))
        self.b_1 = jnp.zeros((F,), jnp.float32)
        self.w_2 = init(ks[5], F, (F, D))
        self.b_2 = jnp.zeros((D,), jnp.float32)
        # LayerNormalization params of the two ResidualConnections.
        self.alpha1 = jnp.ones((D,), jnp.float32)
        self.beta1 = jnp.zeros((D,), jnp.float32)
        self.alpha2 = jnp.ones((D,), jnp.float32)
        self.beta2 = jnp.zeros((D,), jnp.float32)
        # Stacked QKV weight with the 1/sqrt(d_k) score scale folded into w_q.
        scale = 1.0 / math.sqrt(self.d_k)
        self.w_qkv = jnp.stack([self.w_q * scale, self.w_k, self.w_v])   # (3, D, D)

    def __call__(self, x, src_mask):
        B, S, D = x.shape
        H, Dk = self.h, self.d_k

        # Unified sequence padding: every kernel sees aligned row tiles and the
        # attention q/kv tiles divide S_pad exactly.
        s_pad, tq, tkv = _seq_tiles(S)
        x_p = _pad_axis(x, 1, s_pad)                      # (B, S_pad, D)
        x2d = x_p.reshape(B * s_pad, D)

        # Additive key-padding mask (0 = keep, -1e9 = drop); padded keys dropped.
        keep = _pad_axis(src_mask.reshape(B, 1, S) != 0, 2, s_pad)
        mask_bias = jnp.where(keep, 0.0, -1e9).astype(jnp.float32)   # (B, 1, S_pad)

        # residual 0: x = x + W_O( attention( LN1(x) @ W_{q,k,v} ) )
        qkv = ln_linear_pallas(x2d, self.alpha1, self.beta1, self.w_qkv,
                               eps=self.eps)
        qkv = qkv.reshape(3, B, s_pad, D)                 # free reshape
        attn = attention_pallas(qkv, mask_bias, heads=H, d_k=Dk, tq=tq, tkv=tkv)
        attn2d = attn.reshape(B * s_pad, D)
        x2d = linear_pallas(attn2d, self.w_o, residual=x2d)    # fused residual add

        # residual 1: x = x + linear_2( relu( LN2(x) @ W_1 + b_1 ) )
        hid = ln_linear_pallas(x2d, self.alpha2, self.beta2, self.w_1[None],
                               bias=self.b_1, activation="relu", eps=self.eps)[0]
        x2d = linear_pallas(hid, self.w_2, b=self.b_2, residual=x2d)

        out = x2d.reshape(B, s_pad, D)
        return out[:, :S, :] if s_pad != S else out


# --------------------------------------------------------------------------
# Pure-JAX reference (mirrors the PyTorch module semantics, default precision).
# --------------------------------------------------------------------------
def _reference_encoder_block(blk, x, src_mask):
    eps = blk.eps

    def ln(t, a, b):
        mean = jnp.mean(t, -1, keepdims=True)
        var = jnp.sum((t - mean) ** 2, -1, keepdims=True) / (t.shape[-1] - 1)
        return a * (t - mean) / (jnp.sqrt(var) + eps) + b

    B, S, D = x.shape
    H, Dk = blk.h, blk.d_k

    xn = ln(x, blk.alpha1, blk.beta1)
    q = (xn @ blk.w_q).reshape(B, S, H, Dk).transpose(0, 2, 1, 3)
    k = (xn @ blk.w_k).reshape(B, S, H, Dk).transpose(0, 2, 1, 3)
    v = (xn @ blk.w_v).reshape(B, S, H, Dk).transpose(0, 2, 1, 3)
    scores = jnp.einsum("bhqd,bhkd->bhqk", q, k) / math.sqrt(Dk)
    scores = jnp.where(src_mask == 0, -1e9, scores)
    p = jax.nn.softmax(scores, axis=-1)
    o = jnp.einsum("bhqk,bhkd->bhqd", p, v)
    o = o.transpose(0, 2, 1, 3).reshape(B, S, D)
    x = x + o @ blk.w_o

    xn2 = ln(x, blk.alpha2, blk.beta2)
    ff = jnp.maximum(xn2 @ blk.w_1 + blk.b_1, 0.0)
    return x + ff @ blk.w_2 + blk.b_2


if __name__ == "__main__":
    key = jax.random.PRNGKey(0)
    batch, seq, d_model, n_heads, d_ff = 2, 8, 32, 4, 64

    k_x, k_params = jax.random.split(key)
    x = jax.random.normal(k_x, (batch, seq, d_model), dtype=jnp.float32)
    # Per-batch key padding mask (nonzero = keep); batch 1 masks its last 2 keys.
    key_lens = jnp.array([seq, seq - 2])
    src_mask = (jnp.arange(seq)[None, :] < key_lens[:, None]).astype(jnp.float32)
    src_mask = src_mask.reshape(batch, 1, 1, seq)

    block = EncoderBlockPallas(d_model, d_ff, n_heads, dropout=0.0, key=k_params)
    out = block(x, src_mask)
    out = jax.block_until_ready(out)

    ref = _reference_encoder_block(block, x, src_mask)
    assert out.shape == (batch, seq, d_model)
    max_err = float(jnp.max(jnp.abs(out - ref)))
    # Tolerance accounts for default-precision MXU matmuls and the approximate
    # (EUP) reciprocals used for LayerNorm inv-std and the softmax denominator.
    assert jnp.allclose(out, ref, atol=5e-2, rtol=5e-2), (
        f"mismatch vs reference, max abs err {max_err:.3e}")

    print("KERNEL_OK")
</pallas_src>

<mosaic_0001>
module attributes {stable_mosaic.version = 11 : i64} {
  func.func @_ln_linear_kernel(%arg0: i32, %arg1: i32, %arg2: i32, %arg3: memref<16x32xf32, #tpu.memory_space<vmem>>, %arg4: memref<1x32xf32, #tpu.memory_space<vmem>>, %arg5: memref<1x32xf32, #tpu.memory_space<vmem>>, %arg6: memref<1x32x32xf32, #tpu.memory_space<vmem>>, %arg7: memref<1x16x32xf32, #tpu.memory_space<vmem>>, %arg8: memref<16x32xf32, #tpu.memory_space<vmem>>) attributes {dimension_semantics = [#tpu.dimension_semantics<parallel>, #tpu.dimension_semantics<arbitrary>, #tpu.dimension_semantics<arbitrary>], iteration_bounds = array<i64: 1, 3, 1>, scalar_prefetch = 0 : i64, scratch_operands = 1 : i64, tpu.core_type = #tpu.core_type<tc>, window_params = [{transform_indices = @transform_0, window_bounds = array<i64: 16, 32>}, {pipeline_mode = #tpu.pipeline_mode<synchronous>, transform_indices = @transform_1, window_bounds = array<i64: 1, 32>}, {pipeline_mode = #tpu.pipeline_mode<synchronous>, transform_indices = @transform_2, window_bounds = array<i64: 1, 32>}, {transform_indices = @transform_3, window_bounds = array<i64: 1, 32, 32>}, {transform_indices = @transform_4, window_bounds = array<i64: 1, 16, 32>}]} {
    %c0_i32 = arith.constant 0 : i32
    %0 = arith.cmpi eq, %arg1, %c0_i32 : i32
    %c0_i32_0 = arith.constant 0 : i32
    %1 = arith.cmpi eq, %arg2, %c0_i32_0 : i32
    %2 = arith.andi %0, %1 : i1
    %3 = arith.extui %2 : i1 to i32
    %c0_i32_1 = arith.constant 0 : i32
    %4 = arith.cmpi ne, %3, %c0_i32_1 : i32
    scf.if %4 {
      %c0_9 = arith.constant 0 : index
      %c0_10 = arith.constant 0 : index
      %12 = vector.load %arg3[%c0_9, %c0_10] : memref<16x32xf32, #tpu.memory_space<vmem>>, vector<16x32xf32>
      %cst_11 = arith.constant dense<0.000000e+00> : vector<16xf32>
      %13 = vector.multi_reduction <add>, %12, %cst_11 [1] : vector<16x32xf32> to vector<16xf32>
      %14 = vector.shape_cast %13 : vector<16xf32> to vector<16x1xf32>
      %cst_12 = arith.constant 3.200000e+01 : f32
      %15 = vector.broadcast %cst_12 : f32 to vector<16x1xf32>
      %16 = arith.divf %14, %15 : vector<16x1xf32>
      %17 = vector.broadcast %16 : vector<16x1xf32> to vector<16x32xf32>
      %18 = arith.subf %12, %17 : vector<16x32xf32>
      %19 = arith.mulf %18, %18 : vector<16x32xf32>
      %cst_13 = arith.constant dense<0.000000e+00> : vector<16xf32>
      %20 = vector.multi_reduction <add>, %19, %cst_13 [1] : vector<16x32xf32> to vector<16xf32>
      %21 = vector.shape_cast %20 : vector<16xf32> to vector<16x1xf32>
      %cst_14 = arith.constant 3.100000e+01 : f32
      %22 = vector.broadcast %cst_14 : f32 to vector<16x1xf32>
      %23 = arith.divf %21, %22 : vector<16x1xf32>
      %24 = math.sqrt %23 : vector<16x1xf32>
      %cst_15 = arith.constant 9.99999997E-7 : f32
      %25 = vector.broadcast %cst_15 : f32 to vector<16x1xf32>
      %26 = arith.addf %24, %25 : vector<16x1xf32>
      %27 = tpu.reciprocal %26 {approx = true} : vector<16x1xf32> -> vector<16x1xf32>
      %28 = vector.broadcast %27 : vector<16x1xf32> to vector<16x32xf32>
      %29 = arith.mulf %18, %28 : vector<16x32xf32>
      %c0_16 = arith.constant 0 : index
      %c0_17 = arith.constant 0 : index
      %30 = vector.load %arg4[%c0_16, %c0_17] : memref<1x32xf32, #tpu.memory_space<vmem>>, vector<1x32xf32>
      %31 = vector.broadcast %30 : vector<1x32xf32> to vector<16x32xf32>
      %32 = arith.mulf %29, %31 : vector<16x32xf32>
      %c0_18 = arith.constant 0 : index
      %c0_19 = arith.constant 0 : index
      %33 = vector.load %arg5[%c0_18, %c0_19] : memref<1x32xf32, #tpu.memory_space<vmem>>, vector<1x32xf32>
      %34 = vector.broadcast %33 : vector<1x32xf32> to vector<16x32xf32>
      %35 = arith.addf %32, %34 : vector<16x32xf32>
      %c0_20 = arith.constant 0 : index
      %c0_21 = arith.constant 0 : index
      %36 = vector.load %arg8[%c0_20, %c0_21] : memref<16x32xf32, #tpu.memory_space<vmem>>, vector<16x32xf32>
      tpu.vector_store %arg8[%c0_20, %c0_21], %35 {strides = array<i32>} : memref<16x32xf32, #tpu.memory_space<vmem>>, vector<16x32xf32>,
    } else {
    }
    %c0 = arith.constant 0 : index
    %c0_2 = arith.constant 0 : index
    %5 = vector.load %arg8[%c0, %c0_2] : memref<16x32xf32, #tpu.memory_space<vmem>>, vector<16x32xf32>
    %c0_3 = arith.constant 0 : index
    %c0_4 = arith.constant 0 : index
    %c0_5 = arith.constant 0 : index
    %6 = vector.load %arg6[%c0_3, %c0_4, %c0_5] : memref<1x32x32xf32, #tpu.memory_space<vmem>>, vector<1x32x32xf32>
    %7 = vector.shape_cast %6 : vector<1x32x32xf32> to vector<32x32xf32>
    %cst = arith.constant dense<0.000000e+00> : vector<16x32xf32>
    %8 = tpu.matmul %5, %7, %cst {dimension_numbers = #tpu.dot_dimension_numbers<[1], [0], [0], [1], [0, 0, 1, 1], [], []>} : vector<16x32xf32>, vector<32x32xf32>, vector<16x32xf32> -> vector<16x32xf32>
    %c0_6 = arith.constant 0 : index
    %c0_7 = arith.constant 0 : index
    %c0_8 = arith.constant 0 : index
    %9 = vector.load %arg7[%c0_6, %c0_7, %c0_8] : memref<1x16x32xf32, #tpu.memory_space<vmem>>, vector<1x16x32xf32>
    %10 = vector.shape_cast %9 : vector<1x16x32xf32> to vector<16x32xf32>
    %11 = vector.shape_cast %8 : vector<16x32xf32> to vector<1x16x32xf32>
    tpu.vector_store %arg7[%c0_6, %c0_7, %c0_8], %11 {strides = array<i32>} : memref<1x16x32xf32, #tpu.memory_space<vmem>>, vector<1x16x32xf32>,
    return
  }
  func.func @transform_0(%arg0: i32, %arg1: i32, %arg2: i32) -> (i32, i32) {
    %c0_i32 = arith.constant 0 : i32
    %c0_i32_0 = arith.constant 0 : i32
    return %arg0, %c0_i32 : i32, i32
  }
  func.func @transform_1(%arg0: i32, %arg1: i32, %arg2: i32) -> (i32, i32) {
    %c0_i32 = arith.constant 0 : i32
    %c0_i32_0 = arith.constant 0 : i32
    %c0_i32_1 = arith.constant 0 : i32
    return %c0_i32, %c0_i32_0 : i32, i32
  }
  func.func @transform_2(%arg0: i32, %arg1: i32, %arg2: i32) -> (i32, i32) {
    %c0_i32 = arith.constant 0 : i32
    %c0_i32_0 = arith.constant 0 : i32
    %c0_i32_1 = arith.constant 0 : i32
    return %c0_i32, %c0_i32_0 : i32, i32
  }
  func.func @transform_3(%arg0: i32, %arg1: i32, %arg2: i32) -> (i32, i32, i32) {
    %c0_i32 = arith.constant 0 : i32
    %c0_i32_0 = arith.constant 0 : i32
    return %arg1, %c0_i32, %arg2 : i32, i32, i32
  }
  func.func @transform_4(%arg0: i32, %arg1: i32, %arg2: i32) -> (i32, i32, i32) {
    %c0_i32 = arith.constant 0 : i32
    return %arg1, %arg0, %arg2 : i32, i32, i32
  }
}

</mosaic_0001>

<llo_original>
// kernel: tpu_custom_call.1
$region0: #{tpu_custom_call.1}
  #allocation0 [shape = 'u32[]', space=smem, size = 0x4, offset = 0x4, fixed_abs, tag = 'smem constant byte address 0x4 - core index']
  #allocation1 [shape = 'u32[144,128]{1,0:T(1,128)}', space=vmem, size = 0x12000, scoped, tag = 'internal scratch']
  #allocation2 [shape = 'f32[16,32]{1,0:T(8,128)}', space=vmem, size = 0x2000, scoped, tag = 'scratch operand']
  %s0 = inlined_call_operand.hbm [shape: f32[16,32], index: 0, kind: input, shape index: {}]
  %s1 = inlined_call_operand.vmem [shape: f32[1,32], index: 1, kind: input, shape index: {}]
  %s2 = inlined_call_operand.vmem [shape: f32[1,32], index: 2, kind: input, shape index: {}]
  %s3 = inlined_call_operand.hbm [shape: f32[3,32,32], index: 3, kind: input, shape index: {}]
  %s4 = inlined_call_operand.hbm [shape: f32[3,16,32], index: 4, kind: output, shape index: {}]
  %s5 = sld [smem:[#allocation0]]
  $region61: #{tpu_custom_call.1} parent=0
    _
  %s7 = ssub.s32 1, %s5
  %s8 = scalar_select 0, %s7, %s5
  $region1: #{tpu_custom_call.1} parent=0
    #allocation3 [shape = 'u8[8192]{0}', space=vmem, size = 0x2000, scoped, tag = 'input window, operand 0, single buffered']
    #allocation4 [shape = 's32[2]{0}', space=sflag, size = 0x8, scoped, tag = 'scoped memory for tpu_custom_call.1']
    #allocation5 [shape = 's32[2]{0}', space=sflag, size = 0x8, scoped, tag = 'scoped memory for tpu_custom_call.1']
    #allocation6 [shape = 'u8[32768]{0}', space=vmem, size = 0x8000, scoped, tag = 'input window, operand 3']
    #allocation7 [shape = 's32[2]{0}', space=sflag, size = 0x8, scoped, tag = 'scoped memory for tpu_custom_call.1']
    #allocation8 [shape = 'u8[16384]{0}', space=vmem, size = 0x4000, scoped, tag = 'output window, operand 0']
    %9 = vsyncpa [#allocation4], 0
    %10 = vsyncpa [#allocation7], 0
    %s11 = scalar_lea.sflag [#allocation7], 1
    %12 = vsyncpa %s11, 0
    %13 = vsyncpa [#allocation5], 0
    %s14 = scalar_lea.sflag [#allocation5], 1
    %15 = vsyncpa %s14, 0
    loop: start=0, step=1, limit=5
    $region2: #{tpu_custom_call.1} parent=1 // loop_pre_header
      _
    $region3: #{tpu_custom_call.1} parent=1 // loop_header
      %s17 = sphi 0, %s21
      %p18 = scmp.ge.s32.totalorder %s17, 5
      %s24 = sphi 0, %s43
      %s25 = sphi 0, %s39
      %s26 = sphi 0, %s35
      %s27 = sphi 0, %s24
      %s28 = sphi 0, %s25
      %s29 = sphi 0, %s26
      %s30 = sphi 0, %s27
      %s31 = sphi 0, %s28
      %s32 = sphi 0, %s29
      %s46 = sphi 0, %s48
      %s49 = sphi 0, %s46
      %s50 = sphi 0, %s49
      %s66 = sphi 0, %s50
      %s70 = sphi 0, %s70
      %s72 = sphi 0, %s70
      %s73 = sphi 0, %s72
      %s87 = sphi 0, %s73
      %s91 = sphi 0, %s91
      %s93 = sphi 0, %s91
      %s94 = sphi 0, %s93
      %s108 = sphi 0, %s94
      %s116 = sphi 0, %s118
      %s119 = sphi 0, %s116
      %s120 = sphi 0, %s119
      %s136 = sphi 0, %s120
      %s146 = sphi 0, %s148
      %s149 = sphi 0, %s146
      %s150 = sphi 0, %s149
      %s166 = sphi 0, %s150
    $region4: #{tpu_custom_call.1} parent=1 // loop_header_branch
      %20 = sbr.rel (%p18) target = $region8
    $region5: #{tpu_custom_call.1} parent=1 // loop_body
      %s22 = ssub.s32 %s17, 1
      %s23 = ssub.s32 %s17, 2
      %s33 = sadd.s32 1, %s26
      %p34 = scmp.ge.s32.totalorder %s33, 1
      %s35 = scalar_select %p34, 0, %s33
      %s36 = sadd.s32 1, %s25
      %s37 = scalar_select %p34, %s36, %s25
      %p38 = scmp.ge.s32.totalorder %s37, 3
      %s39 = scalar_select %p38, 0, %s37
      %s40 = sadd.s32 1, %s24
      %s41 = scalar_select %p38, %s40, %s24
      %p42 = scmp.ge.s32.totalorder %s41, 1
      %s43 = scalar_select %p42, 0, %s41
      %s44 = ssub.s32 %s24, %s43
      %p45 = scmp.eq.s32.totalorder %s44, 0
      %s47 = sadd.s32 %s46, 1
      %s48 = scalar_select %p45, %s46, %s47
      %p51 = pneg %p45
      %p52 = scmp.eq.s32.totalorder %s17, 2
      %p53 = por %p51, %p52
      %p54 = scmp.ne.s32.totalorder %s46, %s49
      %p55 = scmp.eq.s32.totalorder %s17, 0
      %p56 = por %p54, %p55
      %p57 = scmp.ne.s32.totalorder %s46, %s49
      %p58 = scmp.eq.s32.totalorder %s22, 2
      %p59 = por %p57, %p58
      %p60 = scmp.ne.s32.totalorder %s49, %s50
      %p61 = scmp.eq.s32.totalorder %s22, 0
      %p62 = por %p60, %p61
      %p63 = scmp.ne.s32.totalorder %s49, %s50
      %p64 = scmp.eq.s32.totalorder %s23, 2
      %p65 = por %p63, %p64
      %p67 = scmp.ne.s32.totalorder %s50, %s66
      %p68 = scmp.eq.s32.totalorder %s23, 0
      %p69 = por %p67, %p68
      %s71 = sadd.s32 %s70, 1
      %p74 = scmp.eq.s32.totalorder %s17, 2
      %p75 = scmp.ne.s32.totalorder %s70, %s72
      %p76 = scmp.eq.s32.totalorder %s17, 0
      %p77 = por %p75, %p76
      %p78 = scmp.ne.s32.totalorder %s70, %s72
      %p79 = scmp.eq.s32.totalorder %s22, 2
      %p80 = por %p78, %p79
      %p81 = scmp.ne.s32.totalorder %s72, %s73
      %p82 = scmp.eq.s32.totalorder %s22, 0
      %p83 = por %p81, %p82
      %p84 = scmp.ne.s32.totalorder %s72, %s73
      %p85 = scmp.eq.s32.totalorder %s23, 2
      %p86 = por %p84, %p85
      %p88 = scmp.ne.s32.totalorder %s73, %s87
      %p89 = scmp.eq.s32.totalorder %s23, 0
      %p90 = por %p88, %p89
      %s92 = sadd.s32 %s91, 1
      %p95 = scmp.eq.s32.totalorder %s17, 2
      %p96 = scmp.ne.s32.totalorder %s91, %s93
      %p97 = scmp.eq.s32.totalorder %s17, 0
      %p98 = por %p96, %p97
      %p99 = scmp.ne.s32.totalorder %s91, %s93
      %p100 = scmp.eq.s32.totalorder %s22, 2
      %p101 = por %p99, %p100
      %p102 = scmp.ne.s32.totalorder %s93, %s94
      %p103 = scmp.eq.s32.totalorder %s22, 0
      %p104 = por %p102, %p103
      %p105 = scmp.ne.s32.totalorder %s93, %s94
      %p106 = scmp.eq.s32.totalorder %s23, 2
      %p107 = por %p105, %p106
      %p109 = scmp.ne.s32.totalorder %s94, %s108
      %p110 = scmp.eq.s32.totalorder %s23, 0
      %p111 = por %p109, %p110
      %s112 = ssub.s32 %s25, %s39
      %s113 = ssub.s32 %s26, %s35
      %s114 = sor.u32 %s112, %s113
      %p115 = scmp.eq.s32.totalorder %s114, 0
      %s117 = sadd.s32 %s116, 1
      %s118 = scalar_select %p115, %s116, %s117
      %p121 = pneg %p115
      %p122 = scmp.eq.s32.totalorder %s17, 2
      %p123 = por %p121, %p122
      %p124 = scmp.ne.s32.totalorder %s116, %s119
      %p125 = scmp.eq.s32.totalorder %s17, 0
      %p126 = por %p124, %p125
      %p127 = scmp.ne.s32.totalorder %s116, %s119
      %p128 = scmp.eq.s32.totalorder %s22, 2
      %p129 = por %p127, %p128
      %p130 = scmp.ne.s32.totalorder %s119, %s120
      %p131 = scmp.eq.s32.totalorder %s22, 0
      %p132 = por %p130, %p131
      %p133 = scmp.ne.s32.totalorder %s119, %s120
      %p134 = scmp.eq.s32.totalorder %s23, 2
      %p135 = por %p133, %p134
      %p137 = scmp.ne.s32.totalorder %s120, %s136
      %p138 = scmp.eq.s32.totalorder %s23, 0
      %p139 = por %p137, %p138
      %s140 = ssub.s32 %s25, %s39
      %s141 = ssub.s32 %s24, %s43
      %s142 = sor.u32 %s140, %s141
      %s143 = ssub.s32 %s26, %s35
      %s144 = sor.u32 %s142, %s143
      %p145 = scmp.eq.s32.totalorder %s144, 0
      %s147 = sadd.s32 %s146, 1
      %s148 = scalar_select %p145, %s146, %s147
      %p151 = pneg %p145
      %p152 = scmp.eq.s32.totalorder %s17, 2
      %p153 = por %p151, %p152
      %p154 = scmp.ne.s32.totalorder %s146, %s149
      %p155 = scmp.eq.s32.totalorder %s17, 0
      %p156 = por %p154, %p155
      %p157 = scmp.ne.s32.totalorder %s146, %s149
      %p158 = scmp.eq.s32.totalorder %s22, 2
      %p159 = por %p157, %p158
      %p160 = scmp.ne.s32.totalorder %s149, %s150
      %p161 = scmp.eq.s32.totalorder %s22, 0
      %p162 = por %p160, %p161
      %p163 = scmp.ne.s32.totalorder %s149, %s150
      %p164 = scmp.eq.s32.totalorder %s23, 2
      %p165 = por %p163, %p164
      %p167 = scmp.ne.s32.totalorder %s150, %s166
      %p168 = scmp.eq.s32.totalorder %s23, 0
      %p169 = por %p167, %p168
      %p170 = scmp.le.s32.totalorder 1, %s17
      %p171 = scmp.lt.s32.totalorder %s17, 4
      %p172 = pnand %p170, %p171
      %p173 = pneg %p172
      // Predicated region
      $region9: #{tpu_custom_call.1} parent=5 // pred_check
        _
      $region10: #{tpu_custom_call.1} parent=5 // pred_check_branch
        %175 = sbr.rel (%p172) target = $region12
      $region11: #{tpu_custom_call.1} parent=5 // pred_region
        %s176 = ssub.s32 %s17, 1
        // Predicated region
        $region13: #{tpu_custom_call.1} parent=11 // pred_check
          %p177 = pneg %p62
        $region14: #{tpu_custom_call.1} parent=11 // pred_check_branch
          %179 = sbr.rel (%p177) target = $region16
        $region15: #{tpu_custom_call.1} parent=11 // pred_region
          %s180 = smul.u32 2, %s27
          %s182 = ssub.s32 256, 256
          %183 = vsyncadd [#allocation4], %s182
          %s184 = smul.addr %s180, 128
          %s185 = scalar_lea.hbm %s0, %s184
          %s186 = sshll.u32 [#allocation3], 4
          %s187 = int_to_ptr.vmem [resolvable:$true] %s186
          %192 = dma.hbm_to_vmem [thread:$0]  %s185, 256, %s187, [#allocation4], 128, 128, 8
        $region16: #{tpu_custom_call.1} parent=11 // pred_fallthru
          _
        // Predicated region
        $region17: #{tpu_custom_call.1} parent=11 // pred_check
          %p193 = pneg %p83
        $region18: #{tpu_custom_call.1} parent=11 // pred_check_branch
          %195 = sbr.rel (%p193) target = $region20
        $region19: #{tpu_custom_call.1} parent=11 // pred_region
          _
        $region20: #{tpu_custom_call.1} parent=11 // pred_fallthru
          _
        // Predicated region
        $region21: #{tpu_custom_call.1} parent=11 // pred_check
          %p196 = pneg %p104
        $region22: #{tpu_custom_call.1} parent=11 // pred_check_branch
          %198 = sbr.rel (%p196) target = $region24
        $region23: #{tpu_custom_call.1} parent=11 // pred_region
          _
        $region24: #{tpu_custom_call.1} parent=11 // pred_fallthru
          _
      $region12: #{tpu_custom_call.1} parent=5 // pred_fallthru
        _
      %p199 = scmp.lt.s32.totalorder %s17, 3
      // Predicated region
      $region25: #{tpu_custom_call.1} parent=5 // pred_check
        %p200 = pneg %p199
      $region26: #{tpu_custom_call.1} parent=5 // pred_check_branch
        %202 = sbr.rel (%p200) target = $region28
      $region27: #{tpu_custom_call.1} parent=5 // pred_region
        // Predicated region
        $region29: #{tpu_custom_call.1} parent=27 // pred_check
          %p203 = pneg %p126
        $region30: #{tpu_custom_call.1} parent=27 // pred_check_branch
          %205 = sbr.rel (%p203) target = $region32
        $region31: #{tpu_custom_call.1} parent=27 // pred_region
          %s206 = sand.u32 %s116, 1
          %s207 = scalar_lea.sflag [#allocation7], %s206
          %s208 = sand.u32 %s116, 1
          %s209 = smul.addr %s208, 32
          %s210 = scalar_lea.vmem [#allocation6], %s209
          %s212 = ssub.s32 512, 512
          %213 = vsyncadd %s207, %s212
          %s214 = smul.addr %s25, 4
          %s215 = sadd.s32 %s26, %s214
          %s216 = smul.addr %s215, 128
          %s217 = scalar_lea.hbm %s3, %s216
          %s218 = sshll.u32 %s210, 4
          %s219 = int_to_ptr.vmem [resolvable:$true] %s218
          %224 = dma.hbm_to_vmem [thread:$0]  %s217, 512, %s219, %s207, 128, 128, 8
        $region32: #{tpu_custom_call.1} parent=27 // pred_fallthru
          _
      $region28: #{tpu_custom_call.1} parent=5 // pred_fallthru
        _
      %p225 = scmp.le.s32.totalorder 1, %s17
      %p226 = scmp.lt.s32.totalorder %s17, 4
      %p227 = pnand %p225, %p226
      %p228 = pneg %p227
      // Predicated region
      $region33: #{tpu_custom_call.1} parent=5 // pred_check
        _
      $region34: #{tpu_custom_call.1} parent=5 // pred_check_branch
        %230 = sbr.rel (%p227) target = $region36
      $region35: #{tpu_custom_call.1} parent=5 // pred_region
        %s231 = ssub.s32 %s17, 1
        // Predicated region
        $region37: #{tpu_custom_call.1} parent=35 // pred_check
          %p232 = pneg %p62
        $region38: #{tpu_custom_call.1} parent=35 // pred_check_branch
          %234 = sbr.rel (%p232) target = $region40
        $region39: #{tpu_custom_call.1} parent=35 // pred_region
          %235 = dma.done [#allocation4], 256
        $region40: #{tpu_custom_call.1} parent=35 // pred_fallthru
          _
        %s236 = sand.u32 %s119, 1
        %s237 = scalar_lea.sflag [#allocation7], %s236
        %s238 = sand.u32 %s119, 1
        %s239 = smul.addr %s238, 32
        %s240 = scalar_lea.vmem [#allocation6], %s239
        // Predicated region
        $region41: #{tpu_custom_call.1} parent=35 // pred_check
          %p241 = pneg %p132
        $region42: #{tpu_custom_call.1} parent=35 // pred_check_branch
          %243 = sbr.rel (%p241) target = $region44
        $region43: #{tpu_custom_call.1} parent=35 // pred_region
          %244 = dma.done %s237, 512
        $region44: #{tpu_custom_call.1} parent=35 // pred_fallthru
          _
        %p245 = pneg %p62
        %p246 = pneg %p59
        %p247 = pneg %p83
        %p248 = pneg %p80
        %p249 = pneg %p104
        %p250 = pneg %p101
        %s251 = sand.u32 %s119, 1
        %s252 = scalar_lea.sflag [#allocation7], %s251
        %s253 = sand.u32 %s119, 1
        %s254 = smul.addr %s253, 32
        %s255 = scalar_lea.vmem [#allocation6], %s254
        %p256 = pneg %p132
        %p257 = pneg %p129
        %p258 = pneg %p162
        %p259 = pneg %p159
        %s260 = sand.u32 %s149, 1
        %s261 = scalar_lea.sflag [#allocation5], %s260
        %s262 = sand.u32 %s149, 1
        %s263 = smul.addr %s262, 16
        %s264 = scalar_lea.vmem [#allocation8], %s263
        %s265 = smul.u32 2, %s27
        %s266 = smul.u32 2, %s27
        %p267 = scmp.eq.s32.totalorder %s28, 0
        %p268 = scmp.eq.s32.totalorder %s29, 0
        %p269 = pnand %p267, %p268
        %p270 = pneg %p269
        // Predicated region
        $region45: #{tpu_custom_call.1} parent=35 // pred_check
          _
        $region46: #{tpu_custom_call.1} parent=35 // pred_check_branch
          %272 = sbr.rel (%p269) target = $region48
        $region47: #{tpu_custom_call.1} parent=35 // pred_region
          %v273 = vld [vmem:[#allocation3] sm:$0xff]
          %v274 = vld [vmem:[#allocation3 + $0x8] sm:$0xff]
          %vm275 = vcmask 261120
          %v276 = vsel %vm275, %v273, 0.0
          %277 = vadd.xlane.f32.xlu0 %v276
          %v278 = vpop.xlane.xlu0 %277
          %v279 = vsel %vm275, %v274, 0.0
          %280 = vadd.xlane.f32.xlu0 %v279
          %v281 = vpop.xlane.xlu0 %280
          %v282 = vrcp.pop 32.0
          %v283 = vmul.f32 %v278, %v282
          %v284 = vmul.f32 %v281, %v282
          %v285 = vsub.f32 %v273, %v283
          %v286 = vsub.f32 %v274, %v284
          %v287 = vmul.f32 %v285, %v285
          %v288 = vmul.f32 %v286, %v286
          %v289 = vsel %vm275, %v287, 0.0
          %290 = vadd.xlane.f32.xlu0 %v289
          %v291 = vpop.xlane.xlu0 %290
          %v292 = vsel %vm275, %v288, 0.0
          %293 = vadd.xlane.f32.xlu0 %v292
          %v294 = vpop.xlane.xlu0 %293
          %v295 = vrcp.pop 31.0
          %v296 = vmul.f32 %v291, %v295
          %v297 = vmul.f32 %v294, %v295
          %v298 = vrsqrt.pop %v296
          %v299 = vmul.f32 %v296, %v298
          %vm300 = vcmp.eq.f32.partialorder %v296, inf
          %v301 = vsel %vm300, %v296, %v299
          %vm302 = vcmp.eq.f32.partialorder %v296, 0.0
          %v303 = vand.u32 %v296, 2147483648
          %v304 = vsel %vm302, %v303, %v301
          %v305 = vrsqrt.pop %v297
          %v306 = vmul.f32 %v297, %v305
          %vm307 = vcmp.eq.f32.partialorder %v297, inf
          %v308 = vsel %vm307, %v297, %v306
          %vm309 = vcmp.eq.f32.partialorder %v297, 0.0
          %v310 = vand.u32 %v297, 2147483648
          %v311 = vsel %vm309, %v310, %v308
          %v312 = vadd.f32 %v304, 1e-06
          %v313 = vadd.f32 %v311, 1e-06
          %v314 = vrcp.pop %v312
          %v315 = vrcp.pop %v313
          %v316 = vmul.f32 %v285, %v314
          %v317 = vmul.f32 %v286, %v315
          %v318 = vld [vmem:[%s1] sm:$0x1]
          %v320 = vlaneseq
          %v321 = vshrl.u32 %v320, 7
          %v322 = vsub.s32 0, %v321
          %v323 = vrot.slane %v318, %v322
          %v325 = vmul.f32 %v316, %v323
          %v326 = vmul.f32 %v317, %v323
          %v327 = vld [vmem:[%s2] sm:$0x1]
          %v329 = vlaneseq
          %v330 = vshrl.u32 %v329, 7
          %v331 = vsub.s32 0, %v330
          %v332 = vrot.slane %v327, %v331
          %v334 = vadd.f32 %v325, %v332
          %v335 = vadd.f32 %v326, %v332
          %336 = vst.msk [vmem:[#allocation2] sm:$0xff] %vm275, %v334
          %337 = vst.msk [vmem:[#allocation2 + $0x8] sm:$0xff] %vm275, %v335
        $region48: #{tpu_custom_call.1} parent=35 // pred_fallthru
          _
        %v338 = vld [vmem:[#allocation2] sm:$0xff]
        %v339 = vld [vmem:[#allocation2 + $0x8] sm:$0xff]
        %v340 = vld [vmem:[%s240] sm:$0xff]
        %v341 = vld [vmem:[%s240 + $0x8] sm:$0xff]
        %v342 = vld [vmem:[%s240 + $0x10] sm:$0xff]
        %v343 = vld [vmem:[%s240 + $0x18] sm:$0xff]
        %vm344 = vcmask 261120
        %v346 = vsel %vm344, %v338, 0
        %v349 = vsel %vm344, %v339, 0
        %351 = vmatprep.subr.mxu0 0.0
        %352 = vmatpush1.msra.mxu0 %v340
        %353 = vmatprep.subr.mxu0 0.0
        %354 = vmatpush1.msra.mxu0 %v341
        %355 = vmatprep.subr.mxu0 0.0
        %356 = vmatpush1.msra.mxu0 %v342
        %357 = vmatprep.subr.mxu0 0.0
        %358 = vmatpush1.msra.mxu0 %v343
        %359 = vmatprep.subr.mxu0 0.0
        %360 = vmatpush1.msra.mxu0 0.0
        %361 = vmatprep.subr.mxu0 0.0
        %362 = vmatpush1.msra.mxu0 0.0
        %363 = vmatprep.subr.mxu0 0.0
        %364 = vmatpush1.msra.mxu0 0.0
        %365 = vmatprep.subr.mxu0 0.0
        %366 = vmatpush1.msra.mxu0 0.0
        %367 = vmatprep.subr.mxu0 0.0
        %368 = vmatpush1.msra.mxu0 0.0
        %369 = vmatprep.subr.mxu0 0.0
        %370 = vmatpush1.msra.mxu0 0.0
        %371 = vmatprep.subr.mxu0 0.0
        %372 = vmatpush1.msra.mxu0 0.0
        %373 = vmatprep.subr.mxu0 0.0
        %374 = vmatpush1.msra.mxu0 0.0
        %375 = vmatprep.subr.mxu0 0.0
        %376 = vmatpush1.msra.mxu0 0.0
        %377 = vmatprep.subr.mxu0 0.0
        %378 = vmatpush1.msra.mxu0 0.0
        %379 = vmatprep.subr.mxu0 0.0
        %380 = vmatpush1.msra.mxu0 0.0
        %381 = vmatprep.subr.mxu0 0.0
        %382 = vmatpush1.msra.mxu0 0.0
        %383 = vmatprep.subr.mxu0 0.0
        %384 = vmatpush1.msra.mxu0 0.0
        %385 = vmatprep.subr.mxu0 0.0
        %386 = vmatpush1.msra.mxu0 0.0
        %387 = vmatprep.subr.mxu0 0.0
        %388 = vmatpush1.msra.mxu0 0.0
        %389 = vmatprep.subr.mxu0 0.0
        %390 = vmatpush1.msra.mxu0 0.0
        %391 = vmatprep.subr.mxu0 0.0
        %392 = vmatpush1.msra.mxu0 0.0
        %393 = vmatprep.subr.mxu0 0.0
        %394 = vmatpush1.msra.mxu0 0.0
        %395 = vmatprep.subr.mxu0 0.0
        %396 = vmatpush1.msra.mxu0 0.0
        %397 = vmatprep.subr.mxu0 0.0
        %398 = vmatpush1.msra.mxu0 0.0
        %399 = vmatprep.subr.mxu0 0.0
        %400 = vmatpush1.msra.mxu0 0.0
        %401 = vmatprep.subr.mxu0 0.0
        %402 = vmatpush1.msra.mxu0 0.0
        %403 = vmatprep.subr.mxu0 0.0
        %404 = vmatpush1.msra.mxu0 0.0
        %405 = vmatprep.subr.mxu0 0.0
        %406 = vmatpush1.msra.mxu0 0.0
        %407 = vmatprep.subr.mxu0 0.0
        %408 = vmatpush1.msra.mxu0 0.0
        %409 = vmatprep.subr.mxu0 0.0
        %410 = vmatpush1.msra.mxu0 0.0
        %411 = vmatprep.subr.mxu0 0.0
        %412 = vmatpush1.msra.mxu0 0.0
        %413 = vmatprep.subr.mxu0 0.0
        %414 = vmatpush1.msra.mxu0 0.0
        %415 = vmatprep.mubr.f32.mxu0 0.0
        %416 = vmatmul.mubr.f32.gmra.mrb[0].mxu0 %v346
        %v417 = vpop.f32.mrb[0].mxu0
        %v418 = vadd.f32 0.0, %v417
        %v419 = vpop.f32.mrb[0].mxu0
        %420 = vmatprep.mubr.f32.mxu0 0.0
        %421 = vmatmul.mubr.f32.gmra.mrb[0].mxu0 %v349
        %v422 = vpop.f32.mrb[0].mxu0
        %v423 = vadd.f32 0.0, %v422
        %v424 = vpop.f32.mrb[0].mxu0
        %425 = vdwg.mxu0
        %426 = vst.msk [vmem:[%s264] sm:$0xff] %vm344, %v418
        %427 = vst.msk [vmem:[%s264 + $0x8] sm:$0xff] %vm344, %v423
        %s428 = sand.u32 %s149, 1
        %s429 = scalar_lea.sflag [#allocation5], %s428
        %s430 = sand.u32 %s149, 1
        %s431 = smul.addr %s430, 16
        %s432 = scalar_lea.vmem [#allocation8], %s431
        // Predicated region
        $region49: #{tpu_custom_call.1} parent=35 // pred_check
          %p433 = pneg %p159
        $region50: #{tpu_custom_call.1} parent=35 // pred_check_branch
          %435 = sbr.rel (%p433) target = $region52
        $region51: #{tpu_custom_call.1} parent=35 // pred_region
          %s436 = smul.u32 2, %s27
          %s438 = ssub.s32 256, 256
          %439 = vsyncadd %s429, %s438
          %s440 = sadd.s32 %s29, %s436
          %s441 = smul.addr %s28, 2
          %s442 = sadd.s32 %s440, %s441
          %s443 = smul.addr %s442, 128
          %s444 = scalar_lea.hbm %s4, %s443
          %s445 = sshll.u32 %s432, 4
          %s446 = int_to_ptr.vmem [resolvable:$true] %s445
          %451 = dma.vmem_to_hbm [thread:$0]  %s446, 256, %s444, %s429, 128, 128, 8
        $region52: #{tpu_custom_call.1} parent=35 // pred_fallthru
          _
      $region36: #{tpu_custom_call.1} parent=5 // pred_fallthru
        _
      %p452 = scmp.le.s32.totalorder 2, %s17
      // Predicated region
      $region53: #{tpu_custom_call.1} parent=5 // pred_check
        %p453 = pneg %p452
      $region54: #{tpu_custom_call.1} parent=5 // pred_check_branch
        %455 = sbr.rel (%p453) target = $region56
      $region55: #{tpu_custom_call.1} parent=5 // pred_region
        %s456 = ssub.s32 %s17, 2
        // Predicated region
        $region57: #{tpu_custom_call.1} parent=55 // pred_check
          %p457 = pneg %p165
        $region58: #{tpu_custom_call.1} parent=55 // pred_check_branch
          %459 = sbr.rel (%p457) target = $region60
        $region59: #{tpu_custom_call.1} parent=55 // pred_region
          %s460 = sand.u32 %s150, 1
          %s461 = scalar_lea.sflag [#allocation5], %s460
          %s462 = sand.u32 %s150, 1
          %s463 = smul.addr %s462, 16
          %s464 = scalar_lea.vmem [#allocation8], %s463
          %465 = dma.done %s461, 256
        $region60: #{tpu_custom_call.1} parent=55 // pred_fallthru
          _
      $region56: #{tpu_custom_call.1} parent=5 // pred_fallthru
        _
    $region6: #{tpu_custom_call.1} parent=1 // loop_footer
      %s21 = sadd.s32 1, %s17
    $region7: #{tpu_custom_call.1} parent=1 // loop_footer_branch
      %16 = sbr.rel target = $region3
    $region8: #{tpu_custom_call.1} parent=1 // loop_exit
      _
    %466 = vsyncpa [#allocation4], 1
    %s467 = scalar_lea.sflag [#allocation4], 1
    %468 = vsyncpa %s467, 1
    %469 = vsyncpa [#allocation7], 1
    %s470 = scalar_lea.sflag [#allocation7], 1
    %471 = vsyncpa %s470, 1
    %472 = vsyncpa [#allocation5], 1
    %s473 = scalar_lea.sflag [#allocation5], 1
    %474 = vsyncpa %s473, 1

</llo_original>
